<compile_context>
chip_gen: v5e
topology: v5e:2x2
jax: 0.10.0
libtpu: 0.0.40
codegen_flags: <defaults>
</compile_context>

<pallas_src>
import functools

import jax
import jax.numpy as jnp
from jax.experimental import pallas as pl
from jax.experimental.pallas import tpu as pltpu


def _round_up(x, m):
    return ((x + m - 1) // m) * m


# ----------------------------------------------------------------------------
# Kernel 1: SAGE conv  y = relu([x | agg] @ [W_self; W_neigh] + b)
# ----------------------------------------------------------------------------
def _sage_conv_kernel(xa_ref, w_ref, b_ref, o_ref):
    y = jnp.dot(xa_ref[...].astype(jnp.bfloat16), w_ref[...],
                preferred_element_type=jnp.float32)
    o_ref[...] = jnp.maximum(y + b_ref[...], 0.0)


def sage_conv(xa, w_stack_bf16, b, *, tile_n=256):
    n, k = xa.shape
    d = w_stack_bf16.shape[1]
    tile_n = min(tile_n, _round_up(n, 8))
    n_pad = _round_up(n, tile_n)
    if n_pad != n:
        xa = jnp.pad(xa, ((0, n_pad - n), (0, 0)))
    out = pl.pallas_call(
        _sage_conv_kernel,
        out_shape=jax.ShapeDtypeStruct((n_pad, d), jnp.float32),
        grid=(n_pad // tile_n,),
        in_specs=[
            pl.BlockSpec((tile_n, k), lambda i: (i, 0)),   # node tile
            pl.BlockSpec((k, d), lambda i: (0, 0)),        # stacked weight (resident)
            pl.BlockSpec((1, d), lambda i: (0, 0)),        # bias (resident)
        ],
        out_specs=pl.BlockSpec((tile_n, d), lambda i: (i, 0)),
        compiler_params=pltpu.CompilerParams(
            dimension_semantics=("parallel",),
            vmem_limit_bytes=32 * 1024 * 1024),
    )(xa, w_stack_bf16, b)
    return out[:n]


# ----------------------------------------------------------------------------
# Kernel 2: fused edge kernel = endpoint gather + concat-as-K-split + 6-layer MLP
# ----------------------------------------------------------------------------
def _fused_edge_mlp_kernel(v_ref, u_ref, ef_ref, x_ref,
                           w0v_ref, w0u_ref, w0e_ref, b0_ref,
                           w1_ref, b1_ref, w2_ref, b2_ref,
                           w3_ref, b3_ref, w4_ref, b4_ref,
                           w5_ref, b5_ref, o_ref, *, num_nodes):
    tile_e = v_ref.shape[0]

    # ---- endpoint gather as a one-hot matmul against the resident node table
    node_ids = jax.lax.broadcasted_iota(jnp.int32, (tile_e, num_nodes), 1)
    oh_v = jnp.where(v_ref[...] == node_ids, 1.0, 0.0).astype(jnp.bfloat16)
    oh_u = jnp.where(u_ref[...] == node_ids, 1.0, 0.0).astype(jnp.bfloat16)
    x_nodes = x_ref[...]                                   # (N, D) bf16
    xv = jnp.dot(oh_v, x_nodes, preferred_element_type=jnp.float32)
    xu = jnp.dot(oh_u, x_nodes, preferred_element_type=jnp.float32)

    # ---- layer 0: concat realised as K-split matmuls (no `pair` buffer)
    h = jnp.dot(xv.astype(jnp.bfloat16), w0v_ref[...],
                preferred_element_type=jnp.float32)
    h = h + jnp.dot(xu.astype(jnp.bfloat16), w0u_ref[...],
                    preferred_element_type=jnp.float32)
    h = h + jnp.dot(ef_ref[...], w0e_ref[...],
                    preferred_element_type=jnp.float32)
    h = jnp.maximum(h + b0_ref[...], 0.0)

    # ---- layers 1..5 stay resident (never round-trip HBM); bf16 MXU, f32 acc
    for w_ref, b_ref, relu in ((w1_ref, b1_ref, True),
                               (w2_ref, b2_ref, True),
                               (w3_ref, b3_ref, True),
                               (w4_ref, b4_ref, True),
                               (w5_ref, b5_ref, False)):
        h = jnp.dot(h.astype(jnp.bfloat16), w_ref[...],
                    preferred_element_type=jnp.float32) + b_ref[...]
        if relu:
            h = jnp.maximum(h, 0.0)

    o_ref[...] = h   # (tile_e, 128), lane-dense; real logit is column 0


def fused_edge_mlp(x_nodes, edge_index, edge_features, mlp_packed, *,
                   tile_e=128):
    # tile_e can be raised to 1024-2048 for realistic edge counts; kept modest
    # here so the double-buffered working set fits v7x's smaller VMEM too.
    num_edges = edge_index.shape[1]
    num_nodes, node_dim = x_nodes.shape
    fe = edge_features.shape[1]

    tile_e = min(tile_e, _round_up(num_edges, 8))
    e_pad = _round_up(num_edges, tile_e)

    v = edge_index[0].astype(jnp.int32).reshape(num_edges, 1)
    u = edge_index[1].astype(jnp.int32).reshape(num_edges, 1)
    ef = edge_features.astype(jnp.bfloat16)
    if e_pad != num_edges:
        pad = ((0, e_pad - num_edges), (0, 0))
        v = jnp.pad(v, pad)      # padded edges point at node 0; rows sliced off
        u = jnp.pad(u, pad)
        ef = jnp.pad(ef, pad)
    x_bf = x_nodes.astype(jnp.bfloat16)

    m = mlp_packed
    weight_args = [x_bf,
                   m[0]["w_v"], m[0]["w_u"], m[0]["w_e"], m[0]["b"],
                   m[1]["w"], m[1]["b"], m[2]["w"], m[2]["b"],
                   m[3]["w"], m[3]["b"], m[4]["w"], m[4]["b"],
                   m[5]["w"], m[5]["b"]]

    edge_spec = lambda cols: pl.BlockSpec((tile_e, cols), lambda i: (i, 0))
    resident_spec = lambda a: pl.BlockSpec(a.shape, lambda i: (0, 0))
    in_specs = ([edge_spec(1), edge_spec(1), edge_spec(fe)]
                + [resident_spec(a) for a in weight_args])

    flops_per_edge = 2 * (2 * num_nodes * node_dim          # one-hot gathers
                          + (2 * node_dim + fe) * 512        # layer 0 (K-split)
                          + 512 * 256 + 256 * 128 + 128 * 64
                          + 64 * 32 + 32 * 128)
    bytes_accessed = (e_pad * (2 * 4 + fe * 2 + 128 * 4)
                      + sum(int(a.size) * a.dtype.itemsize for a in weight_args))
    cost = pl.CostEstimate(flops=int(e_pad * flops_per_edge),
                           transcendentals=0,
                           bytes_accessed=int(bytes_accessed))

    kernel = functools.partial(_fused_edge_mlp_kernel, num_nodes=int(num_nodes))
    out = pl.pallas_call(
        kernel,
        out_shape=jax.ShapeDtypeStruct((e_pad, 128), jnp.float32),
        grid=(e_pad // tile_e,),
        in_specs=in_specs,
        out_specs=pl.BlockSpec((tile_e, 128), lambda i: (i, 0)),
        compiler_params=pltpu.CompilerParams(
            dimension_semantics=("parallel",),
            vmem_limit_bytes=32 * 1024 * 1024),
        cost_estimate=cost,
    )(v, u, ef, *weight_args)
    return out[:num_edges, :1]


# ----------------------------------------------------------------------------
# Parameters
# ----------------------------------------------------------------------------
def init_params(key, node_dim, edge_dim):
    """Canonical f32 parameters (eval-mode BatchNorm folded into linears)."""
    keys = jax.random.split(key, 32)
    ki = iter(range(32))

    def lin(d_in, d_out):
        w = 0.1 * jax.random.normal(keys[next(ki)], (d_in, d_out), jnp.float32)
        b = 0.1 * jax.random.normal(keys[next(ki)], (1, d_out), jnp.float32)
        return w, b

    # SAGE conv (single instance shared across layers, as in the torch code).
    w_self, b = lin(node_dim, node_dim)
    w_neigh, _ = lin(node_dim, node_dim)
    params = {"conv": {"w_self": w_self, "w_neigh": w_neigh, "b": b}}

    dims = [2 * node_dim + edge_dim, 512, 256, 128, 64, 32, 1]
    bn_layers = {0, 1}             # BatchNorm1d follows linears 0 and 1
    relu_layers = {0, 1, 2, 3, 4}  # ReLU follows all but the last linear
    bn_scale = 1.0 / jnp.sqrt(1.0 + 1e-5)   # eval BN with default stats
    mlp = []
    for i in range(len(dims) - 1):
        w, bb = lin(dims[i], dims[i + 1])
        if i in bn_layers:         # fold eval-mode BatchNorm into the linear
            w, bb = w * bn_scale, bb * bn_scale
        mlp.append({"w": w, "b": bb, "relu": i in relu_layers})
    params["mlp"] = mlp
    return params


def pack_params(params, node_dim):
    """Kernel-ready params: bf16 weights, W0 K-split, last layer lane-padded."""
    conv = params["conv"]
    packed = {"conv": {
        "w": jnp.concatenate([conv["w_self"], conv["w_neigh"]], axis=0)
               .astype(jnp.bfloat16),
        "b": conv["b"]}}
    mlp = []
    n_layers = len(params["mlp"])
    for i, layer in enumerate(params["mlp"]):
        w, b = layer["w"], layer["b"]
        if i == 0:                 # split K so [xv | xu | ef] is never built
            mlp.append({"w_v": w[:node_dim].astype(jnp.bfloat16),
                        "w_u": w[node_dim:2 * node_dim].astype(jnp.bfloat16),
                        "w_e": w[2 * node_dim:].astype(jnp.bfloat16),
                        "b": b})
        elif i == n_layers - 1:    # pad N=1 -> 128 so output stores are lane-dense
            wp = jnp.zeros((w.shape[0], 128), jnp.float32).at[:, :w.shape[1]].set(w)
            bp = jnp.zeros((1, 128), jnp.float32).at[:, :b.shape[1]].set(b)
            mlp.append({"w": wp.astype(jnp.bfloat16), "b": bp})
        else:
            mlp.append({"w": w.astype(jnp.bfloat16), "b": b})
    packed["mlp"] = mlp
    return packed


# ----------------------------------------------------------------------------
# Forward pass
# ----------------------------------------------------------------------------
def custom_graphsage2_forward(packed, x, edge_index, edge_features, num_nodes,
                              num_layers):
    x = x.astype(jnp.float32)
    src, dst = edge_index[0], edge_index[1]
    # Degree depends only on edge structure -> hoisted out of the layer loop.
    deg = jax.ops.segment_sum(jnp.ones((edge_index.shape[1],), jnp.float32),
                              dst, num_segments=num_nodes)
    inv_deg = (1.0 / jnp.maximum(deg, 1.0))[:, None]

    conv = packed["conv"]
    for _ in range(num_layers):
        # TODO(synk): scatter-add neighbor aggregation stays in XLA
        # (segment_sum); a sorted/segmented Pallas aggregation is future work.
        agg = jax.ops.segment_sum(x[src], dst, num_segments=num_nodes) * inv_deg
        xa = jnp.concatenate([x, agg], axis=-1)
        x = sage_conv(xa, conv["w"], conv["b"])   # conv -> dropout(id) -> ReLU

    # One fused pallas_call: endpoint gather + concat + 6-layer MLP over edges.
    return fused_edge_mlp(x, edge_index, edge_features, packed["mlp"])


def _reference_forward(params, x, edge_index, edge_features, num_nodes,
                       num_layers):
    """Pure-JAX f32 reference with identical math (for validation)."""
    x = x.astype(jnp.float32)
    src, dst = edge_index[0], edge_index[1]
    deg = jax.ops.segment_sum(jnp.ones((edge_index.shape[1],), jnp.float32),
                              dst, num_segments=num_nodes)
    inv_deg = (1.0 / jnp.maximum(deg, 1.0))[:, None]
    c = params["conv"]
    for _ in range(num_layers):
        agg = jax.ops.segment_sum(x[src], dst, num_segments=num_nodes) * inv_deg
        x = jnp.maximum(x @ c["w_self"] + agg @ c["w_neigh"] + c["b"], 0.0)
    pair = jnp.concatenate([x[edge_index[0]], x[edge_index[1]],
                            edge_features.astype(jnp.float32)], axis=-1)
    h = pair
    for layer in params["mlp"]:
        h = h @ layer["w"] + layer["b"]
        if layer["relu"]:
            h = jnp.maximum(h, 0.0)
    return h


if __name__ == "__main__":
    node_dim = 16
    edge_dim = 8
    num_layers = 2
    num_nodes = 64
    num_edges = 256

    key = jax.random.PRNGKey(0)
    k_x, k_e, k_ef, k_p = jax.random.split(key, 4)

    x = jax.random.normal(k_x, (num_nodes, node_dim), jnp.float32)
    edge_index = jax.random.randint(k_e, (2, num_edges), 0, num_nodes,
                                    dtype=jnp.int32)
    edge_features = jax.random.normal(k_ef, (num_edges, edge_dim), jnp.float32)

    params = init_params(k_p, node_dim, edge_dim)
    packed = pack_params(params, node_dim)

    pred = custom_graphsage2_forward(packed, x, edge_index, edge_features,
                                     num_nodes, num_layers)
    pred = jax.block_until_ready(pred)

    assert pred.shape == (num_edges, 1), pred.shape
    assert jnp.all(jnp.isfinite(pred))

    # Validate against the pure-JAX f32 reference (loose tolerance: bf16 MXU).
    ref = _reference_forward(params, x, edge_index, edge_features, num_nodes,
                             num_layers)
    rel_err = jnp.max(jnp.abs(pred - ref)) / (jnp.max(jnp.abs(ref)) + 1e-6)
    assert rel_err < 0.1, rel_err

    print("KERNEL_OK")
</pallas_src>

<mosaic_0001>
module attributes {stable_mosaic.version = 11 : i64} {
  func.func @_sage_conv_kernel(%arg0: i32, %arg1: memref<64x32xf32, #tpu.memory_space<vmem>>, %arg2: memref<32x16xbf16, #tpu.memory_space<vmem>>, %arg3: memref<1x16xf32, #tpu.memory_space<vmem>>, %arg4: memref<64x16xf32, #tpu.memory_space<vmem>>) attributes {dimension_semantics = [#tpu.dimension_semantics<parallel>], iteration_bounds = array<i64: 1>, scalar_prefetch = 0 : i64, scratch_operands = 0 : i64, tpu.core_type = #tpu.core_type<tc>, window_params = [{transform_indices = @transform_0, window_bounds = array<i64: 64, 32>}, {pipeline_mode = #tpu.pipeline_mode<synchronous>, transform_indices = @transform_1, window_bounds = array<i64: 32, 16>}, {pipeline_mode = #tpu.pipeline_mode<synchronous>, transform_indices = @transform_2, window_bounds = array<i64: 1, 16>}, {transform_indices = @transform_3, window_bounds = array<i64: 64, 16>}]} {
    %c0 = arith.constant 0 : index
    %c0_0 = arith.constant 0 : index
    %0 = vector.load %arg1[%c0, %c0_0] : memref<64x32xf32, #tpu.memory_space<vmem>>, vector<64x32xf32>
    %1 = arith.truncf %0 : vector<64x32xf32> to vector<64x32xbf16>
    %c0_1 = arith.constant 0 : index
    %c0_2 = arith.constant 0 : index
    %2 = vector.load %arg2[%c0_1, %c0_2] : memref<32x16xbf16, #tpu.memory_space<vmem>>, vector<32x16xbf16>
    %cst = arith.constant dense<0.000000e+00> : vector<64x16xf32>
    %3 = tpu.matmul %1, %2, %cst {dimension_numbers = #tpu.dot_dimension_numbers<[1], [0], [0], [1], [0, 0, 1, 1], [], []>} : vector<64x32xbf16>, vector<32x16xbf16>, vector<64x16xf32> -> vector<64x16xf32>
    %c0_3 = arith.constant 0 : index
    %c0_4 = arith.constant 0 : index
    %4 = vector.load %arg3[%c0_3, %c0_4] : memref<1x16xf32, #tpu.memory_space<vmem>>, vector<1x16xf32>
    %5 = vector.broadcast %4 : vector<1x16xf32> to vector<64x16xf32>
    %6 = arith.addf %3, %5 : vector<64x16xf32>
    %cst_5 = arith.constant 0.000000e+00 : f32
    %7 = vector.broadcast %cst_5 : f32 to vector<64x16xf32>
    %8 = arith.maximumf %6, %7 : vector<64x16xf32>
    %c0_6 = arith.constant 0 : index
    %c0_7 = arith.constant 0 : index
    %9 = vector.load %arg4[%c0_6, %c0_7] : memref<64x16xf32, #tpu.memory_space<vmem>>, vector<64x16xf32>
    tpu.vector_store %arg4[%c0_6, %c0_7], %8 {strides = array<i32>} : memref<64x16xf32, #tpu.memory_space<vmem>>, vector<64x16xf32>,
    return
  }
  func.func @transform_0(%arg0: i32) -> (i32, i32) {
    %c0_i32 = arith.constant 0 : i32
    %c0_i32_0 = arith.constant 0 : i32
    return %arg0, %c0_i32 : i32, i32
  }
  func.func @transform_1(%arg0: i32) -> (i32, i32) {
    %c0_i32 = arith.constant 0 : i32
    %c0_i32_0 = arith.constant 0 : i32
    %c0_i32_1 = arith.constant 0 : i32
    return %c0_i32, %c0_i32_0 : i32, i32
  }
  func.func @transform_2(%arg0: i32) -> (i32, i32) {
    %c0_i32 = arith.constant 0 : i32
    %c0_i32_0 = arith.constant 0 : i32
    %c0_i32_1 = arith.constant 0 : i32
    return %c0_i32, %c0_i32_0 : i32, i32
  }
  func.func @transform_3(%arg0: i32) -> (i32, i32) {
    %c0_i32 = arith.constant 0 : i32
    %c0_i32_0 = arith.constant 0 : i32
    return %arg0, %c0_i32 : i32, i32
  }
}

</mosaic_0001>

<llo_original>
// kernel: tpu_custom_call.1
$region0: #{tpu_custom_call.1}
  #allocation0 [shape = 'u32[]', space=smem, size = 0x4, offset = 0x4, fixed_abs, tag = 'smem constant byte address 0x4 - core index']
  #allocation1 [shape = 'u32[72,128]{1,0:T(1,128)}', space=vmem, size = 0x9000, scoped, tag = 'internal scratch']
  %s0 = inlined_call_operand.vmem [shape: f32[64,32], index: 0, kind: input, shape index: {}]
  %s1 = inlined_call_operand.vmem [shape: bf16[32,16], index: 1, kind: input, shape index: {}]
  %s2 = inlined_call_operand.vmem [shape: f32[1,16], index: 2, kind: input, shape index: {}]
  %s3 = inlined_call_operand.vmem [shape: f32[64,16], index: 3, kind: output, shape index: {}]
  %s4 = sld [smem:[#allocation0]]
  $region22: #{tpu_custom_call.1} parent=0
    _
  %s6 = ssub.s32 1, %s4
  %s7 = scalar_select 0, %s6, %s4
  // Predicated region
  $region2: #{tpu_custom_call.1} parent=0 // pred_check
    _
  $region3: #{tpu_custom_call.1} parent=0 // pred_check_branch
    %9 = sbr.rel (0) target = $region5
  $region4: #{tpu_custom_call.1} parent=0 // pred_region
    _
  $region5: #{tpu_custom_call.1} parent=0 // pred_fallthru
    _
  // Predicated region
  $region6: #{tpu_custom_call.1} parent=0 // pred_check
    _
  $region7: #{tpu_custom_call.1} parent=0 // pred_check_branch
    %11 = sbr.rel (0) target = $region9
  $region8: #{tpu_custom_call.1} parent=0 // pred_region
    _
  $region9: #{tpu_custom_call.1} parent=0 // pred_fallthru
    _
  // Predicated region
  $region10: #{tpu_custom_call.1} parent=0 // pred_check
    _
  $region11: #{tpu_custom_call.1} parent=0 // pred_check_branch
    %13 = sbr.rel (0) target = $region13
  $region12: #{tpu_custom_call.1} parent=0 // pred_region
    _
  $region13: #{tpu_custom_call.1} parent=0 // pred_fallthru
    _
  %v15 = vld [vmem:[%s0] sm:$0xff]
  %v16 = vld [vmem:[%s0 + $0x8] sm:$0xff]
  %v17 = vld [vmem:[%s0 + $0x10] sm:$0xff]
  %v18 = vld [vmem:[%s0 + $0x18] sm:$0xff]
  %v19 = vld [vmem:[%s0 + $0x20] sm:$0xff]
  %v20 = vld [vmem:[%s0 + $0x28] sm:$0xff]
  %v21 = vld [vmem:[%s0 + $0x30] sm:$0xff]
  %v22 = vld [vmem:[%s0 + $0x38] sm:$0xff]
  %v23 = vpack.c.bf16 %v16, %v15
  %v24 = vpack.c.bf16 %v18, %v17
  %v25 = vpack.c.bf16 %v20, %v19
  %v26 = vpack.c.bf16 %v22, %v21
  %v27 = vld [vmem:[%s1] sm:$0xf]
  %v28 = vld [vmem:[%s1 + $0x4] sm:$0xf]
  %v29 = vld [vmem:[%s1 + $0x8] sm:$0xf]
  %v30 = vld [vmem:[%s1 + $0xc] sm:$0xf]
  %v31 = vld [vmem:[%s2] sm:$0x1]
  %v33 = vperm.slane %v31, 0
  %v39 = vunpack.c.l.b16 %v27
  %v40 = vunpack.c.l.b16 %v28
  %v41 = vunpack.c.l.b16 %v29
  %v42 = vunpack.c.l.b16 %v30
  %v43 = vpack.c.b16 %v40, %v39
  %v44 = vpack.c.b16 %v42, %v41
  %vm47 = vcmask 261120
  %v49 = vsel %vm47, %v23, 0
  %v52 = vsel %vm47, %v24, 0
  %v55 = vsel %vm47, %v25, 0
  %v58 = vsel %vm47, %v26, 0
  %60 = vmatpush.bf16.msra.mxu0 0
  %61 = vmatpush.bf16.msra.mxu0 0
  %62 = vmatpush.bf16.msra.mxu0 0
  %63 = vmatpush.bf16.msra.mxu0 0
  %64 = vmatpush.bf16.msra.mxu0 0
  %65 = vmatpush.bf16.msra.mxu0 0
  %66 = vmatpush.bf16.msra.mxu0 %v44
  %67 = vmatpush.bf16.msra.mxu0 %v43
  %68 = vmatmul.bf16.gmra.mxu0 %v49
  %v69 = vpop.f32.mrf.mxu0
  %v70 = vadd.f32 %v33, %v69
  %v71 = vpop.f32.mrf.mxu0
  %v72 = vadd.f32 %v33, %v71
  %73 = vmatmul.bf16.gmra.mxu0 %v52
  %v74 = vpop.f32.mrf.mxu0
  %v75 = vadd.f32 %v33, %v74
  %v76 = vpop.f32.mrf.mxu0
  %v77 = vadd.f32 %v33, %v76
  %78 = vmatmul.bf16.gmra.mxu0 %v55
  %v79 = vpop.f32.mrf.mxu0
  %v80 = vadd.f32 %v33, %v79
  %v81 = vpop.f32.mrf.mxu0
  %v82 = vadd.f32 %v33, %v81
  %83 = vmatmul.bf16.gmra.mxu0 %v58
  %v84 = vpop.f32.mrf.mxu0
  %v85 = vadd.f32 %v33, %v84
  %v86 = vpop.f32.mrf.mxu0
  %v87 = vadd.f32 %v33, %v86
  %88 = vdwg.mxu0
  %v89 = vmax.f32 %v70, 0.0
  %v90 = vmax.f32 %v72, 0.0
  %v91 = vmax.f32 %v75, 0.0
  %v92 = vmax.f32 %v77, 0.0
  %v93 = vmax.f32 %v80, 0.0
  %v94 = vmax.f32 %v82, 0.0
  %v95 = vmax.f32 %v85, 0.0
  %v96 = vmax.f32 %v87, 0.0
  %vm97 = vcmask 130048
  %98 = vst.msk [vmem:[%s3] sm:$0xff] %vm97, %v89
  %99 = vst.msk [vmem:[%s3 + $0x8] sm:$0xff] %vm97, %v90
  %100 = vst.msk [vmem:[%s3 + $0x10] sm:$0xff] %vm97, %v91
  %101 = vst.msk [vmem:[%s3 + $0x18] sm:$0xff] %vm97, %v92
  %102 = vst.msk [vmem:[%s3 + $0x20] sm:$0xff] %vm97, %v93
  %103 = vst.msk [vmem:[%s3 + $0x28] sm:$0xff] %vm97, %v94
  %104 = vst.msk [vmem:[%s3 + $0x30] sm:$0xff] %vm97, %v95
  %105 = vst.msk [vmem:[%s3 + $0x38] sm:$0xff] %vm97, %v96
  // Predicated region
  $region14: #{tpu_custom_call.1} parent=0 // pred_check
    _
  $region15: #{tpu_custom_call.1} parent=0 // pred_check_branch
    %107 = sbr.rel (0) target = $region17
  $region16: #{tpu_custom_call.1} parent=0 // pred_region
    _
  $region17: #{tpu_custom_call.1} parent=0 // pred_fallthru
    _
  // Predicated region
  $region18: #{tpu_custom_call.1} parent=0 // pred_check
    _
  $region19: #{tpu_custom_call.1} parent=0 // pred_check_branch
    %109 = sbr.rel (0) target = $region21
  $region20: #{tpu_custom_call.1} parent=0 // pred_region
    _
  $region21: #{tpu_custom_call.1} parent=0 // pred_fallthru
    _

</llo_original>
